<compile_context>
chip_gen: v7x
topology: tpu7x:2x2x1
jax: 0.10.0
libtpu: 0.0.40
codegen_flags: <defaults>
</compile_context>

<pallas_src>
import jax
import jax.numpy as jnp
from jax import lax
from jax.experimental import pallas as pl
from jax.experimental.pallas import tpu as pltpu


def _round_up(x, m):
    return pl.cdiv(x, m) * m


# ---------------------------------------------------------------------------
# Kernel 1: token-id -> embedding-row gather on the MXU (bf16 one-hot matmul).
# Runs once per token tile; output rows are shared by every bag tile.
# ---------------------------------------------------------------------------
def _gather_rows_kernel(tok_ref,   # (TN, 1)  int32
                        emb_ref,   # (Vp, Dp) bf16
                        rows_ref):  # (TN, Dp) bf16
    tile_n = tok_ref.shape[0]
    vp = emb_ref.shape[0]

    toks = tok_ref[...]                                            # (TN, 1)
    vocab_iota = lax.broadcasted_iota(jnp.int32, (tile_n, vp), 1)
    one_hot = (vocab_iota == toks).astype(jnp.bfloat16)            # exact 0/1
    rows_ref[...] = jnp.dot(one_hot, emb_ref[...],
                            preferred_element_type=jnp.float32
                            ).astype(rows_ref.dtype)


# ---------------------------------------------------------------------------
# Kernel 2: per-bag mean pooling (0/1 assignment matmul) + fused Linear.
# grid = (bag tiles [parallel], token tiles [arbitrary / reduction]).
# ---------------------------------------------------------------------------
def _pool_fc_kernel(starts_ref, ends_ref,   # (TB, 1) int32
                    rows_ref,               # (TN, Dp) bf16
                    w_ref, b_ref,           # (Dp, Cp) bf16, (1, Cp) f32
                    out_ref,                # (TB, Cp) f32
                    acc_ref):               # scratch (TB, Dp) f32
    kt = pl.program_id(1)
    n_kt = pl.num_programs(1)
    tile_b = acc_ref.shape[0]
    tile_n = rows_ref.shape[0]

    @pl.when(kt == 0)
    def _init():
        acc_ref[...] = jnp.zeros_like(acc_ref)

    starts = starts_ref[...]                                       # (TB, 1)
    ends = ends_ref[...]                                           # (TB, 1)
    pos = kt * tile_n + lax.broadcasted_iota(jnp.int32, (tile_b, tile_n), 1)
    # Exact 0/1 bag-membership mask; padded tokens (pos >= N) are excluded.
    assign = jnp.logical_and(pos >= starts, pos < ends).astype(jnp.bfloat16)
    acc_ref[...] += jnp.dot(assign, rows_ref[...],
                            preferred_element_type=jnp.float32)    # (TB, Dp)

    @pl.when(kt == n_kt - 1)
    def _finalize():
        # EmbeddingBag 'mean': empty bag -> zeros (clamp avoids div-by-zero).
        count = jnp.maximum(ends - starts, 1).astype(jnp.float32)  # (TB, 1)
        inv = pl.reciprocal(count, approx=True)                    # EUP slot
        pooled = (acc_ref[...] * inv).astype(jnp.bfloat16)         # (TB, Dp)
        out_ref[...] = (jnp.dot(pooled, w_ref[...],
                                preferred_element_type=jnp.float32)
                        + b_ref[...]).astype(out_ref.dtype)


def text_classifier_forward(text, offsets, emb_table, fc_w, fc_b,
                            *, tile_b_max=256, tile_n_max=256):
    """EmbeddingBag(mean) + Linear.
    text: (N,) int, offsets: (B,) int (bag start indices),
    emb_table: (V, D) f32, fc_w: (C, D) f32, fc_b: (C,) f32  ->  (B, C) f32."""
    n_tok = int(text.shape[0])
    batch = int(offsets.shape[0])
    vocab, dim = emb_table.shape
    n_cls = fc_w.shape[0]

    # Right-size tiles to the real problem (no 128-row padding for batch=2),
    # capped at 256 so big problems fill the v6e/v7x 256^2 MXU.
    tile_b = min(tile_b_max, _round_up(batch, 8))
    tile_n = min(tile_n_max, _round_up(max(n_tok, 1), 8))

    bp = _round_up(batch, tile_b)               # padded batch
    np_ = _round_up(max(n_tok, 1), tile_n)      # padded token count
    vp = _round_up(vocab, 128)                  # lane-dense one-hot
    dp = _round_up(dim, 128)                    # lane-dense embedding rows
    cp = _round_up(n_cls, 128)                  # lane-dense output slab

    offsets = offsets.astype(jnp.int32)
    text = text.astype(jnp.int32)

    # Per-bag [start, end); padded bags are empty (start == end == N) -> zeros.
    starts = jnp.concatenate(
        [offsets, jnp.full((bp - batch,), n_tok, jnp.int32)]).reshape(bp, 1)
    ends = jnp.concatenate(
        [offsets[1:], jnp.array([n_tok], jnp.int32),
         jnp.full((bp - batch,), n_tok, jnp.int32)]).reshape(bp, 1)
    # Padded token positions are excluded by the assignment mask (pos >= N).
    toks = jnp.pad(text, (0, np_ - n_tok)).reshape(np_, 1)

    # bf16 MXU operands; zero padding keeps extra rows/columns inert.
    emb_p = jnp.pad(emb_table.astype(jnp.bfloat16),
                    ((0, vp - vocab), (0, dp - dim)))
    w_p = jnp.pad(jnp.transpose(fc_w).astype(jnp.bfloat16),       # (D, C)
                  ((0, dp - dim), (0, cp - n_cls)))
    b_p = jnp.pad(fc_b.astype(jnp.float32), (0, cp - n_cls)).reshape(1, cp)

    # ---- pass 1: gather embedding rows once per token tile -----------------
    rows = pl.pallas_call(
        _gather_rows_kernel,
        out_shape=jax.ShapeDtypeStruct((np_, dp), jnp.bfloat16),
        grid_spec=pltpu.PrefetchScalarGridSpec(
            num_scalar_prefetch=0,
            grid=(np_ // tile_n,),
            in_specs=[
                pl.BlockSpec((tile_n, 1), lambda k: (k, 0)),   # token ids
                pl.BlockSpec((vp, dp), lambda k: (0, 0)),      # embedding table
            ],
            out_specs=pl.BlockSpec((tile_n, dp), lambda k: (k, 0)),
        ),
        compiler_params=pltpu.CompilerParams(
            dimension_semantics=("parallel",)),
    )(toks, emb_p)

    # ---- pass 2: per-bag mean pooling + fused Linear ------------------------
    out = pl.pallas_call(
        _pool_fc_kernel,
        out_shape=jax.ShapeDtypeStruct((bp, cp), jnp.float32),
        grid_spec=pltpu.PrefetchScalarGridSpec(
            num_scalar_prefetch=0,
            grid=(bp // tile_b, np_ // tile_n),
            in_specs=[
                pl.BlockSpec((tile_b, 1), lambda i, k: (i, 0)),   # bag starts
                pl.BlockSpec((tile_b, 1), lambda i, k: (i, 0)),   # bag ends
                pl.BlockSpec((tile_n, dp), lambda i, k: (k, 0)),  # gathered rows
                pl.BlockSpec((dp, cp), lambda i, k: (0, 0)),      # fc weight (D, C)
                pl.BlockSpec((1, cp), lambda i, k: (0, 0)),       # fc bias
            ],
            out_specs=pl.BlockSpec((tile_b, cp), lambda i, k: (i, 0)),
            scratch_shapes=[pltpu.VMEM((tile_b, dp), jnp.float32)],
        ),
        compiler_params=pltpu.CompilerParams(
            dimension_semantics=("parallel", "arbitrary")),
    )(starts, ends, rows, w_p, b_p)

    return out[:batch, :n_cls]


def _reference(text, offsets, emb_table, fc_w, fc_b):
    """Pure-JAX reference reproducing EmbeddingBag(mean) + Linear."""
    n_tok = text.shape[0]
    batch = offsets.shape[0]
    ends = jnp.concatenate([offsets[1:], jnp.array([n_tok], jnp.int32)])
    pooled = []
    for b in range(batch):
        s, e = int(offsets[b]), int(ends[b])
        if e > s:
            pooled.append(jnp.mean(emb_table[text[s:e]], axis=0))
        else:
            pooled.append(jnp.zeros((emb_table.shape[1],), jnp.float32))
    pooled = jnp.stack(pooled)
    return pooled @ fc_w.T + fc_b


if __name__ == "__main__":
    # Model hyper-parameters (small, consistent with the module's __init__).
    vocab_size, embed_dim, num_classes = 50, 32, 4
    batch, n_tokens = 2, 8

    key = jax.random.PRNGKey(0)
    k_emb, k_fc, k_txt = jax.random.split(key, 3)

    # Deterministic parameter init mirroring init_weights():
    #   embedding.weight ~ U(-0.5, 0.5), fc.weight ~ U(-0.5, 0.5), fc.bias = 0
    initrange = 0.5
    emb_table = jax.random.uniform(k_emb, (vocab_size, embed_dim),
                                   jnp.float32, -initrange, initrange)
    fc_w = jax.random.uniform(k_fc, (num_classes, embed_dim),
                              jnp.float32, -initrange, initrange)
    fc_b = jnp.zeros((num_classes,), jnp.float32)

    # Inputs: 8 tokens total, bag 0 = tokens[0:5], bag 1 = tokens[5:8].
    text = jax.random.randint(k_txt, (n_tokens,), 0, vocab_size, dtype=jnp.int32)
    offsets = jnp.array([0, 5], dtype=jnp.int32)

    out = text_classifier_forward(text, offsets, emb_table, fc_w, fc_b)
    out = jax.block_until_ready(out)

    ref = _reference(text, offsets, emb_table, fc_w, fc_b)
    assert out.shape == (batch, num_classes)
    # Tolerance leaves headroom for bf16 MXU operands with f32 accumulation;
    # any structural bug (wrong gather / pooling / offsets) -> O(0.1)+ errors.
    assert jnp.allclose(out, ref, atol=2e-2, rtol=2e-2), (out, ref)

    print("KERNEL_OK")
</pallas_src>

<mosaic_0001>
module attributes {stable_mosaic.version = 11 : i64} {
  func.func @_gather_rows_kernel(%arg0: i32, %arg1: memref<8x1xi32, #tpu.memory_space<vmem>>, %arg2: memref<128x128xbf16, #tpu.memory_space<vmem>>, %arg3: memref<8x128xbf16, #tpu.memory_space<vmem>>) attributes {dimension_semantics = [#tpu.dimension_semantics<parallel>], iteration_bounds = array<i64: 1>, scalar_prefetch = 0 : i64, scratch_operands = 0 : i64, tpu.core_type = #tpu.core_type<tc>, window_params = [{transform_indices = @transform_0, window_bounds = array<i64: 8, 1>}, {pipeline_mode = #tpu.pipeline_mode<synchronous>, transform_indices = @transform_1, window_bounds = array<i64: 128, 128>}, {transform_indices = @transform_2, window_bounds = array<i64: 8, 128>}]} {
    %c0 = arith.constant 0 : index
    %c0_0 = arith.constant 0 : index
    %0 = vector.load %arg1[%c0, %c0_0] : memref<8x1xi32, #tpu.memory_space<vmem>>, vector<8x1xi32>
    %1 = tpu.iota {dimensions = array<i32: 1>} : vector<8x128xi32>
    %2 = vector.broadcast %0 : vector<8x1xi32> to vector<8x128xi32>
    %3 = arith.cmpi eq, %1, %2 : vector<8x128xi32>
    %4 = arith.extui %3 : vector<8x128xi1> to vector<8x128xi32>
    %5 = arith.sitofp %4 : vector<8x128xi32> to vector<8x128xf32>
    %6 = arith.truncf %5 : vector<8x128xf32> to vector<8x128xbf16>
    %c0_1 = arith.constant 0 : index
    %c0_2 = arith.constant 0 : index
    %7 = vector.load %arg2[%c0_1, %c0_2] : memref<128x128xbf16, #tpu.memory_space<vmem>>, vector<128x128xbf16>
    %cst = arith.constant dense<0.000000e+00> : vector<8x128xf32>
    %8 = tpu.matmul %6, %7, %cst {dimension_numbers = #tpu.dot_dimension_numbers<[1], [0], [0], [1], [0, 0, 1, 1], [], []>} : vector<8x128xbf16>, vector<128x128xbf16>, vector<8x128xf32> -> vector<8x128xf32>
    %9 = arith.truncf %8 : vector<8x128xf32> to vector<8x128xbf16>
    %c0_3 = arith.constant 0 : index
    %c0_4 = arith.constant 0 : index
    %10 = vector.load %arg3[%c0_3, %c0_4] : memref<8x128xbf16, #tpu.memory_space<vmem>>, vector<8x128xbf16>
    tpu.vector_store %arg3[%c0_3, %c0_4], %9 {strides = array<i32>} : memref<8x128xbf16, #tpu.memory_space<vmem>>, vector<8x128xbf16>,
    return
  }
  func.func @transform_0(%arg0: i32) -> (i32, i32) {
    %c0_i32 = arith.constant 0 : i32
    %c0_i32_0 = arith.constant 0 : i32
    return %arg0, %c0_i32 : i32, i32
  }
  func.func @transform_1(%arg0: i32) -> (i32, i32) {
    %c0_i32 = arith.constant 0 : i32
    %c0_i32_0 = arith.constant 0 : i32
    %c0_i32_1 = arith.constant 0 : i32
    return %c0_i32, %c0_i32_0 : i32, i32
  }
  func.func @transform_2(%arg0: i32) -> (i32, i32) {
    %c0_i32 = arith.constant 0 : i32
    %c0_i32_0 = arith.constant 0 : i32
    return %arg0, %c0_i32 : i32, i32
  }
}

</mosaic_0001>

<llo_original>
// kernel: tpu_custom_call.1
$region0: #{tpu_custom_call.1}
  #allocation0 [shape = 'u32[]', space=smem, size = 0x4, offset = 0x4, fixed_abs, tag = 'smem constant byte address 0x4 - core index']
  #allocation1 [shape = 'u32[144,128]{1,0:T(1,128)}', space=vmem, size = 0x12000, scoped, tag = 'internal scratch']
  %s0 = inlined_call_operand.vmem [shape: s32[8,1], index: 0, kind: input, shape index: {}]
  %s1 = inlined_call_operand.hbm [shape: bf16[128,128], index: 1, kind: input, shape index: {}]
  %s2 = inlined_call_operand.hbm [shape: bf16[8,128], index: 2, kind: output, shape index: {}]
  %s3 = sld [smem:[#allocation0]]
  $region22: #{tpu_custom_call.1} parent=0
    _
  %s5 = ssub.s32 1, %s3
  %s6 = scalar_select 0, %s5, %s3
  $region1: #{tpu_custom_call.1} parent=0
    #allocation2 [shape = 'u8[32768]{0}', space=vmem, size = 0x8000, scoped, tag = 'input window, operand 1, single buffered']
    #allocation3 [shape = 's32[1]{0}', space=sflag, size = 0x4, scoped, tag = 'scoped memory for tpu_custom_call.1']
    #allocation4 [shape = 's32[1]{0}', space=sflag, size = 0x4, scoped, tag = 'scoped memory for tpu_custom_call.1']
    #allocation5 [shape = 'u8[2048]{0}', space=vmem, size = 0x800, scoped, tag = 'output window, operand 0, single buffered']
    %7 = vsyncpa [#allocation3], 0
    %8 = vsyncpa [#allocation4], 0
    // Predicated region
    $region2: #{tpu_custom_call.1} parent=1 // pred_check
      _
    $region3: #{tpu_custom_call.1} parent=1 // pred_check_branch
      %10 = sbr.rel (0) target = $region5
    $region4: #{tpu_custom_call.1} parent=1 // pred_region
      _
    $region5: #{tpu_custom_call.1} parent=1 // pred_fallthru
      _
    // Predicated region
    $region6: #{tpu_custom_call.1} parent=1 // pred_check
      _
    $region7: #{tpu_custom_call.1} parent=1 // pred_check_branch
      %12 = sbr.rel (0) target = $region9
    $region8: #{tpu_custom_call.1} parent=1 // pred_region
      %s14 = ssub.s32 1024, 1024
      %15 = vsyncadd [#allocation3], %s14
      %s16 = sshll.u32 [#allocation2], 4
      %s17 = int_to_ptr.vmem [resolvable:$true] %s16
      %22 = dma.hbm_to_vmem [thread:$0]  %s1, 1024, %s17, [#allocation3], 64, 64, 4
    $region9: #{tpu_custom_call.1} parent=1 // pred_fallthru
      _
    // Predicated region
    $region10: #{tpu_custom_call.1} parent=1 // pred_check
      _
    $region11: #{tpu_custom_call.1} parent=1 // pred_check_branch
      %24 = sbr.rel (0) target = $region13
    $region12: #{tpu_custom_call.1} parent=1 // pred_region
      %25 = dma.done [#allocation3], 1024
    $region13: #{tpu_custom_call.1} parent=1 // pred_fallthru
      _
    %v27 = vld [vmem:[%s0] sm:$0xff]
    %v28 = vlaneseq
    %v29 = vand.u32 %v28, 127
    %30 = vset.pattern.permute.xlu0 0
    %31 = vperm.xlu0 %30, %v27
    %v32 = vpop.permute.xlu0 %31
    %vm33 = vcmp.eq.s32.totalorder %v29, %v32
    %v34 = vsel %vm33, 1, 0
    %v35 = vcvt.s32.f32 %v34
    %v36 = vpack.c.bf16 %v35, %v35
    %v37 = vld [vmem:[#allocation2] sm:$0xf]
    %v38 = vld [vmem:[#allocation2 + $0x4] sm:$0xf]
    %v39 = vld [vmem:[#allocation2 + $0x8] sm:$0xf]
    %v40 = vld [vmem:[#allocation2 + $0xc] sm:$0xf]
    %v41 = vld [vmem:[#allocation2 + $0x10] sm:$0xf]
    %v42 = vld [vmem:[#allocation2 + $0x14] sm:$0xf]
    %v43 = vld [vmem:[#allocation2 + $0x18] sm:$0xf]
    %v44 = vld [vmem:[#allocation2 + $0x1c] sm:$0xf]
    %v45 = vld [vmem:[#allocation2 + $0x20] sm:$0xf]
    %v46 = vld [vmem:[#allocation2 + $0x24] sm:$0xf]
    %v47 = vld [vmem:[#allocation2 + $0x28] sm:$0xf]
    %v48 = vld [vmem:[#allocation2 + $0x2c] sm:$0xf]
    %v49 = vld [vmem:[#allocation2 + $0x30] sm:$0xf]
    %v50 = vld [vmem:[#allocation2 + $0x34] sm:$0xf]
    %v51 = vld [vmem:[#allocation2 + $0x38] sm:$0xf]
    %v52 = vld [vmem:[#allocation2 + $0x3c] sm:$0xf]
    %v69 = vunpack.c.l.b16 %v37
    %v70 = vunpack.c.l.b16 %v38
    %v71 = vunpack.c.l.b16 %v39
    %v72 = vunpack.c.l.b16 %v40
    %v73 = vunpack.c.l.b16 %v41
    %v74 = vunpack.c.l.b16 %v42
    %v75 = vunpack.c.l.b16 %v43
    %v76 = vunpack.c.l.b16 %v44
    %v77 = vunpack.c.l.b16 %v45
    %v78 = vunpack.c.l.b16 %v46
    %v79 = vunpack.c.l.b16 %v47
    %v80 = vunpack.c.l.b16 %v48
    %v81 = vunpack.c.l.b16 %v49
    %v82 = vunpack.c.l.b16 %v50
    %v83 = vunpack.c.l.b16 %v51
    %v84 = vunpack.c.l.b16 %v52
    %v85 = vpack.c.b16 %v70, %v69
    %v86 = vpack.c.b16 %v72, %v71
    %v87 = vpack.c.b16 %v74, %v73
    %v88 = vpack.c.b16 %v76, %v75
    %v89 = vpack.c.b16 %v78, %v77
    %v90 = vpack.c.b16 %v80, %v79
    %v91 = vpack.c.b16 %v82, %v81
    %v92 = vpack.c.b16 %v84, %v83
    %101 = vmatprep.subr.bf16.mxu0 0
    %102 = vmatpush1.bf16.msra.mxu0 %v85
    %103 = vmatprep.subr.bf16.mxu0 0
    %104 = vmatpush1.bf16.msra.mxu0 %v86
    %105 = vmatprep.subr.bf16.mxu0 0
    %106 = vmatpush1.bf16.msra.mxu0 %v87
    %107 = vmatprep.subr.bf16.mxu0 0
    %108 = vmatpush1.bf16.msra.mxu0 %v88
    %109 = vmatprep.subr.bf16.mxu0 0
    %110 = vmatpush1.bf16.msra.mxu0 %v89
    %111 = vmatprep.subr.bf16.mxu0 0
    %112 = vmatpush1.bf16.msra.mxu0 %v90
    %113 = vmatprep.subr.bf16.mxu0 0
    %114 = vmatpush1.bf16.msra.mxu0 %v91
    %115 = vmatprep.subr.bf16.mxu0 0
    %116 = vmatpush1.bf16.msra.mxu0 %v92
    %117 = vmatprep.subr.bf16.mxu0 0
    %118 = vmatpush1.bf16.msra.mxu0 0
    %119 = vmatprep.subr.bf16.mxu0 0
    %120 = vmatpush1.bf16.msra.mxu0 0
    %121 = vmatprep.subr.bf16.mxu0 0
    %122 = vmatpush1.bf16.msra.mxu0 0
    %123 = vmatprep.subr.bf16.mxu0 0
    %124 = vmatpush1.bf16.msra.mxu0 0
    %125 = vmatprep.subr.bf16.mxu0 0
    %126 = vmatpush1.bf16.msra.mxu0 0
    %127 = vmatprep.subr.bf16.mxu0 0
    %128 = vmatpush1.bf16.msra.mxu0 0
    %129 = vmatprep.subr.bf16.mxu0 0
    %130 = vmatpush1.bf16.msra.mxu0 0
    %131 = vmatprep.subr.bf16.mxu0 0
    %132 = vmatpush1.bf16.msra.mxu0 0
    %133 = vmatprep.mubr.bf16.mxu0 0
    %134 = vmatmul.mubr.bf16.gmra.mrb[0].mxu0 %v36
    %v135 = vpop.f32.mrb[0].mxu0
    %v136 = vadd.f32 0.0, %v135
    %v137 = vpop.f32.mrb[0].mxu0
    %v138 = vpop.f32.mrb[0].mxu0
    %v139 = vpop.f32.mrb[0].mxu0
    %140 = vdwg.mxu0
    %v141 = vpack.c.bf16 %v136, %v136
    %142 = vst [vmem:[#allocation5] sm:$0xf] %v141
    // Predicated region
    $region14: #{tpu_custom_call.1} parent=1 // pred_check
      _
    $region15: #{tpu_custom_call.1} parent=1 // pred_check_branch
      %144 = sbr.rel (0) target = $region17
    $region16: #{tpu_custom_call.1} parent=1 // pred_region
      %s146 = ssub.s32 64, 64
      %147 = vsyncadd [#allocation4], %s146
      %s149 = sshll.u32 [#allocation5], 4
      %s150 = int_to_ptr.vmem [resolvable:$true] %s149
      %152 = dma.vmem_to_hbm [thread:$0]  %s150, 64, %s2, [#allocation4]
    $region17: #{tpu_custom_call.1} parent=1 // pred_fallthru
      _
    // Predicated region
    $region18: #{tpu_custom_call.1} parent=1 // pred_check
      _
    $region19: #{tpu_custom_call.1} parent=1 // pred_check_branch
      %154 = sbr.rel (0) target = $region21
    $region20: #{tpu_custom_call.1} parent=1 // pred_region
      %155 = dma.done [#allocation4], 64
    $region21: #{tpu_custom_call.1} parent=1 // pred_fallthru
      _
    %156 = vsyncpa [#allocation3], 1
    %157 = vsyncpa [#allocation4], 1

</llo_original>
